<compile_context>
chip_gen: v5e
topology: v5e:2x2
jax: 0.10.0
libtpu: 0.0.40
codegen_flags: <defaults>
</compile_context>

<pallas_src>
import functools

import jax
import jax.numpy as jnp
import numpy as np
from jax.experimental import pallas as pl
from jax.experimental.pallas import tpu as pltpu

LANE = 128          # hidden feature dims padded to a multiple of this
SUBLANE_BF16 = 16   # bf16 packs 16 rows per vreg -> batch/feature row padding
MAX_TILE_N = 1024   # max batch rows per grid step
MIN_SPLIT_N = 512   # above this, force >=2 grid steps (v7x megacore sharding)

_VALID_ACTIVATIONS = ("cas", "relu", "gelu", "tanh", None)


def _round_up(v, m):
    return ((v + m - 1) // m) * m


def _cdiv(a, b):
    return -(-a // b)


def _pad2d(w, rows, cols):
    out = jnp.zeros((rows, cols), w.dtype)
    return out.at[: w.shape[0], : w.shape[1]].set(w)


def _choose_tiling(n):
    """Pick (tile_n, n_pad, num_tiles) with minimal padding and >=2 tiles for
    large batches (so the 'parallel' axis can shard across v7x's 2 TCs)."""
    n_min = _round_up(n, SUBLANE_BF16)
    num_tiles = max(1, _cdiv(n_min, MAX_TILE_N))
    if num_tiles == 1 and n_min >= MIN_SPLIT_N:
        num_tiles = 2
    tile_n = _round_up(_cdiv(n_min, num_tiles), SUBLANE_BF16)
    n_pad = tile_n * num_tiles
    return tile_n, n_pad, num_tiles


# ----------------------------- fused kernel ---------------------------------

def _make_fcnet_kernel(n_hidden, activation, hidden_pads, dout):
    """Build the fused forward kernel.

    Ref layout: (x_ref, *param_refs, o_ref).  For activation == 'cas' each
    hidden block contributes one ref (concatenated sin|cos weight); otherwise
    two refs (weight, bias).  The final LinearBlock contributes (weight, bias).
    Padded weight rows/cols are zero, so padded-column garbage (e.g. cos(0)=1
    in FourierBlock padding) is annihilated by the next layer's zero rows.
    """

    def kernel(x_ref, *refs):
        o_ref = refs[-1]
        params = refs[:-1]

        h = x_ref[...]                       # bf16, stays bf16 between layers
        idx = 0
        for i in range(n_hidden):
            if activation == "cas":
                # FourierBlock: one [Din, 2*Dout] matmul, then split sin/cos.
                w_cat = params[idx][...]
                idx += 1
                y = jnp.dot(h, w_cat, preferred_element_type=jnp.float32)
                dp = hidden_pads[i]
                h = (jnp.sin(y[:, :dp]) + jnp.cos(y[:, dp:])).astype(jnp.bfloat16)
            else:
                w = params[idx][...]
                b = params[idx + 1][...]
                idx += 2
                y = jnp.dot(h, w, preferred_element_type=jnp.float32) + b
                if activation == "relu":
                    a = jnp.maximum(y, 0.0)
                elif activation == "gelu":
                    # PyTorch nn.GELU() default = exact (erf) formulation.
                    a = jax.nn.gelu(y, approximate=False)
                elif activation == "tanh":
                    a = jnp.tanh(y)
                else:                        # activation is None -> identity
                    a = y
                h = a.astype(jnp.bfloat16)

        # Final LinearBlock (no activation); store only the real dout columns.
        wf = params[idx][...]
        bf = params[idx + 1][...]
        out = jnp.dot(h, wf, preferred_element_type=jnp.float32) + bf
        o_ref[...] = out[:, :dout].astype(o_ref.dtype)

    return kernel


# -------------------------------- wrapper ------------------------------------

def fcnet_forward(x, flat_params, *, n_hidden, activation, hidden_pads,
                  fin_pad, dout):
    """x: [N, Fin] -> [N, dout] f32. Intended to be called under jax.jit."""
    n, fin = x.shape
    tile_n, n_pad, num_tiles = _choose_tiling(n)

    # bf16 input (matmul operands are bf16 anyway), minimal row/col padding.
    if n == n_pad and fin == fin_pad:
        x_pad = x.astype(jnp.bfloat16)
    else:
        x_pad = (jnp.zeros((n_pad, fin_pad), jnp.bfloat16)
                 .at[:n, :fin].set(x.astype(jnp.bfloat16)))

    in_specs = [pl.BlockSpec((tile_n, fin_pad), lambda i: (i, 0))]
    for p in flat_params:
        # Weights/biases: full array, same block every step -> VMEM-resident.
        in_specs.append(pl.BlockSpec(p.shape, lambda i: (0, 0)))
    out_specs = pl.BlockSpec((tile_n, dout), lambda i: (i, 0))

    kernel = _make_fcnet_kernel(n_hidden, activation, hidden_pads, dout)
    y = pl.pallas_call(
        kernel,
        out_shape=jax.ShapeDtypeStruct((n_pad, dout), jnp.float32),
        grid_spec=pltpu.PrefetchScalarGridSpec(
            num_scalar_prefetch=0,
            grid=(num_tiles,),
            in_specs=in_specs,
            out_specs=out_specs,
        ),
        compiler_params=pltpu.CompilerParams(
            dimension_semantics=("parallel",),     # batch -> both TCs on v7x
            vmem_limit_bytes=64 * 1024 * 1024,     # headroom for wide layers
        ),
    )(x_pad, *flat_params)
    return y[:n]


# --------------------------- parameter construction --------------------------

def _xavier_uniform(key, fan_in, fan_out):
    bound = (6.0 / (fan_in + fan_out)) ** 0.5
    # PyTorch weight is (out, in); we store transposed (in, out).
    return jax.random.uniform(key, (fan_in, fan_out), jnp.float32,
                              minval=-bound, maxval=bound)


def _default_linear_weight(key, fan_in, fan_out):
    # PyTorch nn.Linear default: kaiming_uniform_(a=sqrt(5)) -> U(+-1/sqrt(fan_in))
    bound = 1.0 / (fan_in ** 0.5)
    return jax.random.uniform(key, (fan_in, fan_out), jnp.float32,
                              minval=-bound, maxval=bound)


def _default_linear_bias(key, fan_in, fan_out):
    bound = 1.0 / (fan_in ** 0.5)
    return jax.random.uniform(key, (fan_out,), jnp.float32,
                              minval=-bound, maxval=bound)


class FCNetPallas:
    """JAX/Pallas reimplementation of FCNet's forward pass (single fused kernel).

    init_weights=True mirrors FCNet(init_weights=True): xavier-uniform weights,
    zero biases.  init_weights=False mirrors PyTorch nn.Linear default init.
    """

    def __init__(self, input_features, hidden_layers, output_features,
                 activation, key, init_weights=True):
        if activation not in _VALID_ACTIVATIONS:
            raise ValueError(f"unsupported activation: {activation!r}")
        self.activation = activation
        self.output_features = output_features
        self.n_hidden = len(hidden_layers)

        dims = [input_features] + list(hidden_layers)
        # Input dim only needs bf16 sublane alignment; hidden dims lane-dense.
        pads = [_round_up(dims[0], SUBLANE_BF16)] + \
               [_round_up(d, LANE) for d in dims[1:]]
        self.din_pad = pads[0]
        self.hidden_pads = tuple(pads[1:])
        self.dout_pad = _round_up(output_features, LANE)

        keys = jax.random.split(key, 4 * (self.n_hidden + 1))
        ki = 0
        flat_params = []

        for i in range(self.n_hidden):
            fin, fout = dims[i], dims[i + 1]
            fin_p, fout_p = pads[i], pads[i + 1]
            if activation == "cas":
                w_init = _xavier_uniform if init_weights else _default_linear_weight
                w_sin = w_init(keys[ki], fin, fout); ki += 1
                w_cos = w_init(keys[ki], fin, fout); ki += 1
                w_cat = jnp.concatenate(
                    [_pad2d(w_sin, fin_p, fout_p), _pad2d(w_cos, fin_p, fout_p)],
                    axis=1).astype(jnp.bfloat16)
                flat_params.append(w_cat)
            else:
                if init_weights:
                    w = _xavier_uniform(keys[ki], fin, fout); ki += 1
                    b = jnp.zeros((fout,), jnp.float32)
                else:
                    w = _default_linear_weight(keys[ki], fin, fout); ki += 1
                    b = _default_linear_bias(keys[ki], fin, fout); ki += 1
                flat_params.append(_pad2d(w, fin_p, fout_p).astype(jnp.bfloat16))
                flat_params.append(_pad2d(b.reshape(1, fout), 1, fout_p))

        # Final LinearBlock, no activation (output cols padded to 128 for the
        # MXU; the kernel slices back to dout before the HBM store).
        fin, fout = dims[-1], output_features
        fin_p = pads[-1]
        if init_weights:
            w = _xavier_uniform(keys[ki], fin, fout); ki += 1
            b = jnp.zeros((fout,), jnp.float32)
        else:
            w = _default_linear_weight(keys[ki], fin, fout); ki += 1
            b = _default_linear_bias(keys[ki], fin, fout); ki += 1
        flat_params.append(_pad2d(w, fin_p, self.dout_pad).astype(jnp.bfloat16))
        flat_params.append(_pad2d(b.reshape(1, fout), 1, self.dout_pad))

        self.flat_params = flat_params

        # Jit the whole boundary (pad + pallas_call + row slice).
        self._forward = jax.jit(functools.partial(
            fcnet_forward,
            n_hidden=self.n_hidden,
            activation=self.activation,
            hidden_pads=self.hidden_pads,
            fin_pad=self.din_pad,
            dout=self.output_features,
        ))

    def __call__(self, x):
        return self._forward(x, self.flat_params)


# ------------------------- pure-JAX reference (check) ------------------------

def _reference_forward(x, net):
    """Same math as the kernel (padded bf16 params, bf16 activations)."""
    # NOTE: this validates the kernel against its own (bf16) math; an f32
    # PyTorch FCNet would differ by ~bf16 rounding (~1e-2).
    n, fin = x.shape
    h = (jnp.zeros((n, net.din_pad), jnp.bfloat16)
         .at[:, :fin].set(x.astype(jnp.bfloat16)))
    idx = 0
    for i in range(net.n_hidden):
        if net.activation == "cas":
            w_cat = net.flat_params[idx]; idx += 1
            y = jnp.dot(h, w_cat, preferred_element_type=jnp.float32)
            dp = net.hidden_pads[i]
            h = (jnp.sin(y[:, :dp]) + jnp.cos(y[:, dp:])).astype(jnp.bfloat16)
        else:
            w = net.flat_params[idx]; b = net.flat_params[idx + 1]; idx += 2
            y = jnp.dot(h, w, preferred_element_type=jnp.float32) + b
            if net.activation == "relu":
                a = jnp.maximum(y, 0.0)
            elif net.activation == "gelu":
                a = jax.nn.gelu(y, approximate=False)
            elif net.activation == "tanh":
                a = jnp.tanh(y)
            else:
                a = y
            h = a.astype(jnp.bfloat16)
    wf = net.flat_params[idx]; bf = net.flat_params[idx + 1]
    y = jnp.dot(h, wf, preferred_element_type=jnp.float32) + bf
    return y[:, : net.output_features]


# ----------------------------------- Main ------------------------------------

if __name__ == "__main__":
    key = jax.random.PRNGKey(0)
    k_x, k_net1, k_net2 = jax.random.split(key, 3)

    # Shapes consistent with FCNet(input_features=16, hidden=[32, 32],
    # output_features=4); batch of 8 samples, layout [N, F].
    batch, input_features, hidden_layers, output_features = 8, 16, [32, 32], 4
    x = jax.random.normal(k_x, (batch, input_features), dtype=jnp.float32)

    # Standard MLP path (LinearBlock with tanh activation).
    net_tanh = FCNetPallas(input_features, hidden_layers, output_features,
                           activation="tanh", key=k_net1, init_weights=True)
    y_tanh = jax.block_until_ready(net_tanh(x))
    assert y_tanh.shape == (batch, output_features)
    ref_tanh = _reference_forward(x, net_tanh)
    np.testing.assert_allclose(np.asarray(y_tanh), np.asarray(ref_tanh),
                               rtol=2e-2, atol=2e-2)

    # Fourier path (activation='cas' -> FourierBlock: sin(xWs) + cos(xWc)).
    net_cas = FCNetPallas(input_features, hidden_layers, output_features,
                          activation="cas", key=k_net2, init_weights=True)
    y_cas = jax.block_until_ready(net_cas(x))
    assert y_cas.shape == (batch, output_features)
    ref_cas = _reference_forward(x, net_cas)
    np.testing.assert_allclose(np.asarray(y_cas), np.asarray(ref_cas),
                               rtol=2e-2, atol=2e-2)

    print("KERNEL_OK")
</pallas_src>

<mosaic_0001>
module attributes {stable_mosaic.version = 11 : i64} {
  func.func @kernel(%arg0: i32, %arg1: memref<16x16xbf16, #tpu.memory_space<vmem>>, %arg2: memref<16x128xbf16, #tpu.memory_space<vmem>>, %arg3: memref<1x128xf32, #tpu.memory_space<vmem>>, %arg4: memref<128x128xbf16, #tpu.memory_space<vmem>>, %arg5: memref<1x128xf32, #tpu.memory_space<vmem>>, %arg6: memref<128x128xbf16, #tpu.memory_space<vmem>>, %arg7: memref<1x128xf32, #tpu.memory_space<vmem>>, %arg8: memref<16x4xf32, #tpu.memory_space<vmem>>) attributes {dimension_semantics = [#tpu.dimension_semantics<parallel>], iteration_bounds = array<i64: 1>, scalar_prefetch = 0 : i64, scratch_operands = 0 : i64, tpu.core_type = #tpu.core_type<tc>, window_params = [{transform_indices = @transform_0, window_bounds = array<i64: 16, 16>}, {pipeline_mode = #tpu.pipeline_mode<synchronous>, transform_indices = @transform_1, window_bounds = array<i64: 16, 128>}, {pipeline_mode = #tpu.pipeline_mode<synchronous>, transform_indices = @transform_2, window_bounds = array<i64: 1, 128>}, {pipeline_mode = #tpu.pipeline_mode<synchronous>, transform_indices = @transform_3, window_bounds = array<i64: 128, 128>}, {pipeline_mode = #tpu.pipeline_mode<synchronous>, transform_indices = @transform_4, window_bounds = array<i64: 1, 128>}, {pipeline_mode = #tpu.pipeline_mode<synchronous>, transform_indices = @transform_5, window_bounds = array<i64: 128, 128>}, {pipeline_mode = #tpu.pipeline_mode<synchronous>, transform_indices = @transform_6, window_bounds = array<i64: 1, 128>}, {transform_indices = @transform_7, window_bounds = array<i64: 16, 4>}]} {
    %c0 = arith.constant 0 : index
    %c0_0 = arith.constant 0 : index
    %0 = vector.load %arg1[%c0, %c0_0] : memref<16x16xbf16, #tpu.memory_space<vmem>>, vector<16x16xbf16>
    %c0_1 = arith.constant 0 : index
    %c0_2 = arith.constant 0 : index
    %1 = vector.load %arg2[%c0_1, %c0_2] : memref<16x128xbf16, #tpu.memory_space<vmem>>, vector<16x128xbf16>
    %c0_3 = arith.constant 0 : index
    %c0_4 = arith.constant 0 : index
    %2 = vector.load %arg3[%c0_3, %c0_4] : memref<1x128xf32, #tpu.memory_space<vmem>>, vector<1x128xf32>
    %cst = arith.constant dense<0.000000e+00> : vector<16x128xf32>
    %3 = tpu.matmul %0, %1, %cst {dimension_numbers = #tpu.dot_dimension_numbers<[1], [0], [0], [1], [0, 0, 1, 1], [], []>} : vector<16x16xbf16>, vector<16x128xbf16>, vector<16x128xf32> -> vector<16x128xf32>
    %4 = vector.broadcast %2 : vector<1x128xf32> to vector<16x128xf32>
    %5 = arith.addf %3, %4 : vector<16x128xf32>
    %6 = math.tanh %5 : vector<16x128xf32>
    %7 = arith.truncf %6 : vector<16x128xf32> to vector<16x128xbf16>
    %c0_5 = arith.constant 0 : index
    %c0_6 = arith.constant 0 : index
    %8 = vector.load %arg4[%c0_5, %c0_6] : memref<128x128xbf16, #tpu.memory_space<vmem>>, vector<128x128xbf16>
    %c0_7 = arith.constant 0 : index
    %c0_8 = arith.constant 0 : index
    %9 = vector.load %arg5[%c0_7, %c0_8] : memref<1x128xf32, #tpu.memory_space<vmem>>, vector<1x128xf32>
    %cst_9 = arith.constant dense<0.000000e+00> : vector<16x128xf32>
    %10 = tpu.matmul %7, %8, %cst_9 {dimension_numbers = #tpu.dot_dimension_numbers<[1], [0], [0], [1], [0, 0, 1, 1], [], []>} : vector<16x128xbf16>, vector<128x128xbf16>, vector<16x128xf32> -> vector<16x128xf32>
    %11 = vector.broadcast %9 : vector<1x128xf32> to vector<16x128xf32>
    %12 = arith.addf %10, %11 : vector<16x128xf32>
    %13 = math.tanh %12 : vector<16x128xf32>
    %14 = arith.truncf %13 : vector<16x128xf32> to vector<16x128xbf16>
    %c0_10 = arith.constant 0 : index
    %c0_11 = arith.constant 0 : index
    %15 = vector.load %arg6[%c0_10, %c0_11] : memref<128x128xbf16, #tpu.memory_space<vmem>>, vector<128x128xbf16>
    %c0_12 = arith.constant 0 : index
    %c0_13 = arith.constant 0 : index
    %16 = vector.load %arg7[%c0_12, %c0_13] : memref<1x128xf32, #tpu.memory_space<vmem>>, vector<1x128xf32>
    %cst_14 = arith.constant dense<0.000000e+00> : vector<16x128xf32>
    %17 = tpu.matmul %14, %15, %cst_14 {dimension_numbers = #tpu.dot_dimension_numbers<[1], [0], [0], [1], [0, 0, 1, 1], [], []>} : vector<16x128xbf16>, vector<128x128xbf16>, vector<16x128xf32> -> vector<16x128xf32>
    %18 = vector.broadcast %16 : vector<1x128xf32> to vector<16x128xf32>
    %19 = arith.addf %17, %18 : vector<16x128xf32>
    %20 = vector.extract_strided_slice %19 {offsets = [0, 0], sizes = [16, 4], strides = [1, 1]} : vector<16x128xf32> to vector<16x4xf32>
    %c0_15 = arith.constant 0 : index
    %c0_16 = arith.constant 0 : index
    %21 = vector.load %arg8[%c0_15, %c0_16] : memref<16x4xf32, #tpu.memory_space<vmem>>, vector<16x4xf32>
    tpu.vector_store %arg8[%c0_15, %c0_16], %20 {strides = array<i32>} : memref<16x4xf32, #tpu.memory_space<vmem>>, vector<16x4xf32>,
    return
  }
  func.func @transform_0(%arg0: i32) -> (i32, i32) {
    %c0_i32 = arith.constant 0 : i32
    %c0_i32_0 = arith.constant 0 : i32
    return %arg0, %c0_i32 : i32, i32
  }
  func.func @transform_1(%arg0: i32) -> (i32, i32) {
    %c0_i32 = arith.constant 0 : i32
    %c0_i32_0 = arith.constant 0 : i32
    %c0_i32_1 = arith.constant 0 : i32
    return %c0_i32, %c0_i32_0 : i32, i32
  }
  func.func @transform_2(%arg0: i32) -> (i32, i32) {
    %c0_i32 = arith.constant 0 : i32
    %c0_i32_0 = arith.constant 0 : i32
    %c0_i32_1 = arith.constant 0 : i32
    return %c0_i32, %c0_i32_0 : i32, i32
  }
  func.func @transform_3(%arg0: i32) -> (i32, i32) {
    %c0_i32 = arith.constant 0 : i32
    %c0_i32_0 = arith.constant 0 : i32
    %c0_i32_1 = arith.constant 0 : i32
    return %c0_i32, %c0_i32_0 : i32, i32
  }
  func.func @transform_4(%arg0: i32) -> (i32, i32) {
    %c0_i32 = arith.constant 0 : i32
    %c0_i32_0 = arith.constant 0 : i32
    %c0_i32_1 = arith.constant 0 : i32
    return %c0_i32, %c0_i32_0 : i32, i32
  }
  func.func @transform_5(%arg0: i32) -> (i32, i32) {
    %c0_i32 = arith.constant 0 : i32
    %c0_i32_0 = arith.constant 0 : i32
    %c0_i32_1 = arith.constant 0 : i32
    return %c0_i32, %c0_i32_0 : i32, i32
  }
  func.func @transform_6(%arg0: i32) -> (i32, i32) {
    %c0_i32 = arith.constant 0 : i32
    %c0_i32_0 = arith.constant 0 : i32
    %c0_i32_1 = arith.constant 0 : i32
    return %c0_i32, %c0_i32_0 : i32, i32
  }
  func.func @transform_7(%arg0: i32) -> (i32, i32) {
    %c0_i32 = arith.constant 0 : i32
    %c0_i32_0 = arith.constant 0 : i32
    return %arg0, %c0_i32 : i32, i32
  }
}

</mosaic_0001>

<llo_original>
// kernel: fcnet_forward.1
$region0: #{fcnet_forward.1}
  #allocation0 [shape = 'u32[]', space=smem, size = 0x4, offset = 0x4, fixed_abs, tag = 'smem constant byte address 0x4 - core index']
  #allocation1 [shape = 'u32[72,128]{1,0:T(1,128)}', space=vmem, size = 0x9000, scoped, tag = 'internal scratch']
  %s0 = inlined_call_operand.vmem [shape: bf16[16,16], index: 0, kind: input, shape index: {}]
  %s1 = inlined_call_operand.vmem [shape: bf16[16,128], index: 1, kind: input, shape index: {}]
  %s2 = inlined_call_operand.vmem [shape: f32[1,128], index: 2, kind: input, shape index: {}]
  %s3 = inlined_call_operand.hbm [shape: bf16[128,128], index: 3, kind: input, shape index: {}]
  %s4 = inlined_call_operand.vmem [shape: f32[1,128], index: 4, kind: input, shape index: {}]
  %s5 = inlined_call_operand.hbm [shape: bf16[128,128], index: 5, kind: input, shape index: {}]
  %s6 = inlined_call_operand.vmem [shape: f32[1,128], index: 6, kind: input, shape index: {}]
  %s7 = inlined_call_operand.vmem [shape: f32[16,4], index: 7, kind: output, shape index: {}]
  %s8 = sld [smem:[#allocation0]]
  $region46: #{fcnet_forward.1} parent=0
    _
  %s10 = ssub.s32 1, %s8
  %s11 = scalar_select 0, %s10, %s8
  $region1: #{fcnet_forward.1} parent=0
    #allocation2 [shape = 'u8[32768]{0}', space=vmem, size = 0x8000, scoped, tag = 'input window, operand 3, single buffered']
    #allocation3 [shape = 's32[1]{0}', space=sflag, size = 0x4, scoped, tag = 'scoped memory for fcnet_forward.1']
    #allocation4 [shape = 'u8[32768]{0}', space=vmem, size = 0x8000, scoped, tag = 'input window, operand 5, single buffered']
    #allocation5 [shape = 's32[1]{0}', space=sflag, size = 0x4, scoped, tag = 'scoped memory for fcnet_forward.1']
    %12 = vsyncpa [#allocation3], 0
    %13 = vsyncpa [#allocation5], 0
    // Predicated region
    $region2: #{fcnet_forward.1} parent=1 // pred_check
      _
    $region3: #{fcnet_forward.1} parent=1 // pred_check_branch
      %15 = sbr.rel (0) target = $region5
    $region4: #{fcnet_forward.1} parent=1 // pred_region
      _
    $region5: #{fcnet_forward.1} parent=1 // pred_fallthru
      _
    // Predicated region
    $region6: #{fcnet_forward.1} parent=1 // pred_check
      _
    $region7: #{fcnet_forward.1} parent=1 // pred_check_branch
      %17 = sbr.rel (0) target = $region9
    $region8: #{fcnet_forward.1} parent=1 // pred_region
      _
    $region9: #{fcnet_forward.1} parent=1 // pred_fallthru
      _
    // Predicated region
    $region10: #{fcnet_forward.1} parent=1 // pred_check
      _
    $region11: #{fcnet_forward.1} parent=1 // pred_check_branch
      %19 = sbr.rel (0) target = $region13
    $region12: #{fcnet_forward.1} parent=1 // pred_region
      _
    $region13: #{fcnet_forward.1} parent=1 // pred_fallthru
      _
    // Predicated region
    $region14: #{fcnet_forward.1} parent=1 // pred_check
      _
    $region15: #{fcnet_forward.1} parent=1 // pred_check_branch
      %21 = sbr.rel (0) target = $region17
    $region16: #{fcnet_forward.1} parent=1 // pred_region
      %23 = vsyncadd [#allocation3], 0
      %s24 = sshll.u32 %s3, 4
      %s25 = int_to_ptr.hbm [resolvable:$true] %s24
      %s26 = sshll.u32 [#allocation2], 4
      %s27 = int_to_ptr.vmem [resolvable:$true] %s26
      %32 = dma.hbm_to_vmem [thread:$0]  %s25, 1024, %s27, [#allocation3], 64, 64, 4
    $region17: #{fcnet_forward.1} parent=1 // pred_fallthru
      _
    // Predicated region
    $region18: #{fcnet_forward.1} parent=1 // pred_check
      _
    $region19: #{fcnet_forward.1} parent=1 // pred_check_branch
      %34 = sbr.rel (0) target = $region21
    $region20: #{fcnet_forward.1} parent=1 // pred_region
      _
    $region21: #{fcnet_forward.1} parent=1 // pred_fallthru
      _
    // Predicated region
    $region22: #{fcnet_forward.1} parent=1 // pred_check
      _
    $region23: #{fcnet_forward.1} parent=1 // pred_check_branch
      %36 = sbr.rel (0) target = $region25
    $region24: #{fcnet_forward.1} parent=1 // pred_region
      %38 = vsyncadd [#allocation5], 0
      %s39 = sshll.u32 %s5, 4
      %s40 = int_to_ptr.hbm [resolvable:$true] %s39
      %s41 = sshll.u32 [#allocation4], 4
      %s42 = int_to_ptr.vmem [resolvable:$true] %s41
      %47 = dma.hbm_to_vmem [thread:$0]  %s40, 1024, %s42, [#allocation5], 64, 64, 4
    $region25: #{fcnet_forward.1} parent=1 // pred_fallthru
      _
    // Predicated region
    $region26: #{fcnet_forward.1} parent=1 // pred_check
      _
    $region27: #{fcnet_forward.1} parent=1 // pred_check_branch
      %49 = sbr.rel (0) target = $region29
    $region28: #{fcnet_forward.1} parent=1 // pred_region
      _
    $region29: #{fcnet_forward.1} parent=1 // pred_fallthru
      _
    // Predicated region
    $region30: #{fcnet_forward.1} parent=1 // pred_check
      _
    $region31: #{fcnet_forward.1} parent=1 // pred_check_branch
      %51 = sbr.rel (0) target = $region33
    $region32: #{fcnet_forward.1} parent=1 // pred_region
      %53 = dma.done [#allocation3], 1024
    $region33: #{fcnet_forward.1} parent=1 // pred_fallthru
      _
    // Predicated region
    $region34: #{fcnet_forward.1} parent=1 // pred_check
      _
    $region35: #{fcnet_forward.1} parent=1 // pred_check_branch
      %55 = sbr.rel (0) target = $region37
    $region36: #{fcnet_forward.1} parent=1 // pred_region
      %57 = dma.done [#allocation5], 1024
    $region37: #{fcnet_forward.1} parent=1 // pred_fallthru
      _
    %v59 = vld [vmem:[%s0] sm:$0xf]
    %v60 = vld [vmem:[%s0 + $0x4] sm:$0xf]
    %v61 = vld [vmem:[%s1] sm:$0xf]
    %v62 = vld [vmem:[%s1 + $0x4] sm:$0xf]
    %v63 = vld [vmem:[%s2] sm:$0x1]
    %v65 = vperm.slane %v63, 0
    %v69 = vunpack.c.l.b16 %v59
    %v70 = vunpack.c.l.b16 %v60
    %v71 = vpack.c.b16 %v70, %v69
    %v74 = vunpack.c.l.b16 %v61
    %v75 = vunpack.c.l.b16 %v62
    %v76 = vpack.c.b16 %v75, %v74
    %vm78 = vcmask 130048
    %v80 = vsel %vm78, %v71, 0
    %82 = vmatpush.bf16.msra.mxu0 0
    %83 = vmatpush.bf16.msra.mxu0 0
    %84 = vmatpush.bf16.msra.mxu0 0
    %85 = vmatpush.bf16.msra.mxu0 0
    %86 = vmatpush.bf16.msra.mxu0 0
    %87 = vmatpush.bf16.msra.mxu0 0
    %88 = vmatpush.bf16.msra.mxu0 0
    %89 = vmatpush.bf16.msra.mxu0 %v76
    %90 = vmatmul.bf16.gmra.mxu0 %v80
    %v91 = vpop.f32.mrf.mxu0
    %v92 = vadd.f32 %v65, %v91
    %v93 = vpop.f32.mrf.mxu0
    %v94 = vadd.f32 %v65, %v93
    %95 = vdwg.mxu0
    %v96 = vtanh.pop %v92
    %v97 = vtanh.pop %v94
    %v98 = vpack.c.bf16 %v97, %v96
    %v99 = vld [vmem:[#allocation2] sm:$0xf]
    %v100 = vld [vmem:[#allocation2 + $0x4] sm:$0xf]
    %v101 = vld [vmem:[#allocation2 + $0x8] sm:$0xf]
    %v102 = vld [vmem:[#allocation2 + $0xc] sm:$0xf]
    %v103 = vld [vmem:[#allocation2 + $0x10] sm:$0xf]
    %v104 = vld [vmem:[#allocation2 + $0x14] sm:$0xf]
    %v105 = vld [vmem:[#allocation2 + $0x18] sm:$0xf]
    %v106 = vld [vmem:[#allocation2 + $0x1c] sm:$0xf]
    %v107 = vld [vmem:[#allocation2 + $0x20] sm:$0xf]
    %v108 = vld [vmem:[#allocation2 + $0x24] sm:$0xf]
    %v109 = vld [vmem:[#allocation2 + $0x28] sm:$0xf]
    %v110 = vld [vmem:[#allocation2 + $0x2c] sm:$0xf]
    %v111 = vld [vmem:[#allocation2 + $0x30] sm:$0xf]
    %v112 = vld [vmem:[#allocation2 + $0x34] sm:$0xf]
    %v113 = vld [vmem:[#allocation2 + $0x38] sm:$0xf]
    %v114 = vld [vmem:[#allocation2 + $0x3c] sm:$0xf]
    %v115 = vld [vmem:[%s4] sm:$0x1]
    %v117 = vperm.slane %v115, 0
    %v135 = vunpack.c.l.b16 %v99
    %v136 = vunpack.c.l.b16 %v100
    %v137 = vunpack.c.l.b16 %v101
    %v138 = vunpack.c.l.b16 %v102
    %v139 = vunpack.c.l.b16 %v103
    %v140 = vunpack.c.l.b16 %v104
    %v141 = vunpack.c.l.b16 %v105
    %v142 = vunpack.c.l.b16 %v106
    %v143 = vunpack.c.l.b16 %v107
    %v144 = vunpack.c.l.b16 %v108
    %v145 = vunpack.c.l.b16 %v109
    %v146 = vunpack.c.l.b16 %v110
    %v147 = vunpack.c.l.b16 %v111
    %v148 = vunpack.c.l.b16 %v112
    %v149 = vunpack.c.l.b16 %v113
    %v150 = vunpack.c.l.b16 %v114
    %v151 = vpack.c.b16 %v136, %v135
    %v152 = vpack.c.b16 %v138, %v137
    %v153 = vpack.c.b16 %v140, %v139
    %v154 = vpack.c.b16 %v142, %v141
    %v155 = vpack.c.b16 %v144, %v143
    %v156 = vpack.c.b16 %v146, %v145
    %v157 = vpack.c.b16 %v148, %v147
    %v158 = vpack.c.b16 %v150, %v149
    %167 = vmatpush.bf16.msra.mxu0 %v158
    %168 = vmatpush.bf16.msra.mxu0 %v157
    %169 = vmatpush.bf16.msra.mxu0 %v156
    %170 = vmatpush.bf16.msra.mxu0 %v155
    %171 = vmatpush.bf16.msra.mxu0 %v154
    %172 = vmatpush.bf16.msra.mxu0 %v153
    %173 = vmatpush.bf16.msra.mxu0 %v152
    %174 = vmatpush.bf16.msra.mxu0 %v151
    %175 = vmatmul.bf16.gmra.mxu0 %v98
    %v176 = vpop.f32.mrf.mxu0
    %v177 = vadd.f32 %v117, %v176
    %v178 = vpop.f32.mrf.mxu0
    %v179 = vadd.f32 %v117, %v178
    %180 = vdwg.mxu0
    %v181 = vtanh.pop %v177
    %v182 = vtanh.pop %v179
    %v183 = vpack.c.bf16 %v182, %v181
    %v184 = vld [vmem:[#allocation4] sm:$0xf]
    %v185 = vld [vmem:[#allocation4 + $0x4] sm:$0xf]
    %v186 = vld [vmem:[#allocation4 + $0x8] sm:$0xf]
    %v187 = vld [vmem:[#allocation4 + $0xc] sm:$0xf]
    %v188 = vld [vmem:[#allocation4 + $0x10] sm:$0xf]
    %v189 = vld [vmem:[#allocation4 + $0x14] sm:$0xf]
    %v190 = vld [vmem:[#allocation4 + $0x18] sm:$0xf]
    %v191 = vld [vmem:[#allocation4 + $0x1c] sm:$0xf]
    %v192 = vld [vmem:[#allocation4 + $0x20] sm:$0xf]
    %v193 = vld [vmem:[#allocation4 + $0x24] sm:$0xf]
    %v194 = vld [vmem:[#allocation4 + $0x28] sm:$0xf]
    %v195 = vld [vmem:[#allocation4 + $0x2c] sm:$0xf]
    %v196 = vld [vmem:[#allocation4 + $0x30] sm:$0xf]
    %v197 = vld [vmem:[#allocation4 + $0x34] sm:$0xf]
    %v198 = vld [vmem:[#allocation4 + $0x38] sm:$0xf]
    %v199 = vld [vmem:[#allocation4 + $0x3c] sm:$0xf]
    %v200 = vld [vmem:[%s6] sm:$0x1]
    %v202 = vperm.slane %v200, 0
    %v220 = vunpack.c.l.b16 %v184
    %v221 = vunpack.c.l.b16 %v185
    %v222 = vunpack.c.l.b16 %v186
    %v223 = vunpack.c.l.b16 %v187
    %v224 = vunpack.c.l.b16 %v188
    %v225 = vunpack.c.l.b16 %v189
    %v226 = vunpack.c.l.b16 %v190
    %v227 = vunpack.c.l.b16 %v191
    %v228 = vunpack.c.l.b16 %v192
    %v229 = vunpack.c.l.b16 %v193
    %v230 = vunpack.c.l.b16 %v194
    %v231 = vunpack.c.l.b16 %v195
    %v232 = vunpack.c.l.b16 %v196
    %v233 = vunpack.c.l.b16 %v197
    %v234 = vunpack.c.l.b16 %v198
    %v235 = vunpack.c.l.b16 %v199
    %v236 = vpack.c.b16 %v221, %v220
    %v237 = vpack.c.b16 %v223, %v222
    %v238 = vpack.c.b16 %v225, %v224
    %v239 = vpack.c.b16 %v227, %v226
    %v240 = vpack.c.b16 %v229, %v228
    %v241 = vpack.c.b16 %v231, %v230
    %v242 = vpack.c.b16 %v233, %v232
    %v243 = vpack.c.b16 %v235, %v234
    %252 = vmatpush.bf16.msra.mxu0 %v243
    %253 = vmatpush.bf16.msra.mxu0 %v242
    %254 = vmatpush.bf16.msra.mxu0 %v241
    %255 = vmatpush.bf16.msra.mxu0 %v240
    %256 = vmatpush.bf16.msra.mxu0 %v239
    %257 = vmatpush.bf16.msra.mxu0 %v238
    %258 = vmatpush.bf16.msra.mxu0 %v237
    %259 = vmatpush.bf16.msra.mxu0 %v236
    %260 = vmatmul.bf16.gmra.mxu0 %v183
    %v261 = vpop.f32.mrf.mxu0
    %v262 = vadd.f32 %v202, %v261
    %v263 = vpop.f32.mrf.mxu0
    %v264 = vadd.f32 %v202, %v263
    %265 = vdwg.mxu0
    %vm266 = vcmask 31744
    %267 = vst.msk [vmem:[%s7] sm:$0xff] %vm266, %v262
    %268 = vst.msk [vmem:[%s7 + $0x8] sm:$0xff] %vm266, %v264
    // Predicated region
    $region38: #{fcnet_forward.1} parent=1 // pred_check
      _
    $region39: #{fcnet_forward.1} parent=1 // pred_check_branch
      %270 = sbr.rel (0) target = $region41
    $region40: #{fcnet_forward.1} parent=1 // pred_region
      _
    $region41: #{fcnet_forward.1} parent=1 // pred_fallthru
      _
    // Predicated region
    $region42: #{fcnet_forward.1} parent=1 // pred_check
      _
    $region43: #{fcnet_forward.1} parent=1 // pred_check_branch
      %272 = sbr.rel (0) target = $region45
    $region44: #{fcnet_forward.1} parent=1 // pred_region
      _
    $region45: #{fcnet_forward.1} parent=1 // pred_fallthru
      _
    %273 = vsyncpa [#allocation3], 1
    %274 = vsyncpa [#allocation5], 1

</llo_original>
